<compile_context>
chip_gen: v7x
topology: tpu7x:2x2x1
jax: 0.10.0
libtpu: 0.0.40
codegen_flags: <defaults>
</compile_context>

<pallas_src>
import functools

import jax
import jax.numpy as jnp
import numpy as np
from jax.experimental import pallas as pl
from jax.experimental.pallas import tpu as pltpu


def _group_conv_gn_relu_kernel(patches_ref, w_ref, params_ref, o_ref,
                               *, eps, group_norm, apply_relu, bn, ho_wo):
    """One (group, batch-tile) block.

    patches_ref: (Kdim, bn*Ho*Wo)    bf16 im2col slab, lanes ordered sample-major
    w_ref:       (Cout_g, Kdim)      bf16 conv weights for this group
    params_ref:  (3, Cout_g, 1)      f32 [bias, gamma, beta] for this group
    o_ref:       (Cout_g, bn*Ho*Wo)  lane-dense output
    """
    cout_g = o_ref.shape[0]

    # Single MXU matmul with f32 accumulation.
    acc = jnp.dot(w_ref[...], patches_ref[...],
                  preferred_element_type=jnp.float32)        # (Cout_g, bn*HoWo)
    acc = acc + params_ref[0]                                 # bias, lane broadcast

    if not group_norm:
        y = jnp.maximum(acc, 0.0) if apply_relu else acc
        o_ref[...] = y.astype(o_ref.dtype)
        return

    gamma = params_ref[1]                                     # (Cout_g, 1)
    beta = params_ref[2]                                      # (Cout_g, 1)
    inv_n = jnp.float32(1.0 / (cout_g * ho_wo))

    # GroupNorm statistics are per (sample, group): short static loop over the
    # samples packed into this block's lane dimension.
    for n in range(bn):
        sl = acc[:, n * ho_wo:(n + 1) * ho_wo]                # (Cout_g, HoWo)
        mean = jnp.sum(sl) * inv_n
        centered = sl - mean
        var = jnp.sum(centered * centered) * inv_n            # two-pass: stable
        scale = gamma * jax.lax.rsqrt(var + eps)              # (Cout_g, 1)
        shift = beta - mean * scale                           # (Cout_g, 1)
        y = sl * scale + shift                                # single FMA tail
        if apply_relu:
            y = jnp.maximum(y, 0.0)
        o_ref[:, n * ho_wo:(n + 1) * ho_wo] = y.astype(o_ref.dtype)


def group_conv2d(x_nchw, weight_g, bias, gamma, beta, *, stride, padding,
                 groups, eps=1e-5, group_norm=True, apply_relu=True):
    """Grouped Conv2d + GroupNorm(groups) + ReLU.  Input/output are NCHW.

    weight_g: (G, KH, KW, Cin_g, Cout_g) group-major HWIO-per-group weights.
    """
    N, Cin, H, W = x_nchw.shape
    G, KH, KW, Cin_g, Cout_g = weight_g.shape
    assert G == groups and Cin == G * Cin_g
    Hp, Wp = H + 2 * padding, W + 2 * padding
    Ho = (Hp - KH) // stride + 1
    Wo = (Wp - KW) // stride + 1
    Cout = G * Cout_g
    Kdim = KH * KW * Cin_g
    HoWo = Ho * Wo

    # ---- host glue: pad, split groups, im2col to (G, Kdim, N*Ho*Wo) ----
    # TODO(synk): at production channel counts, build patches inside the kernel to
    # avoid the KH*KW x HBM read amplification of a materialised im2col array.
    xp = jnp.pad(x_nchw, ((0, 0), (0, 0), (padding, padding), (padding, padding)))
    xg = xp.reshape(N, G, Cin_g, Hp, Wp)
    slabs = []
    for kh in range(KH):
        for kw in range(KW):
            sl = xg[:, :, :,
                    kh:kh + (Ho - 1) * stride + 1:stride,
                    kw:kw + (Wo - 1) * stride + 1:stride]       # (N,G,Cin_g,Ho,Wo)
            slabs.append(sl)
    patches = jnp.stack(slabs, axis=2)                          # (N,G,KH*KW,Cin_g,Ho,Wo)
    patches = patches.reshape(N, G, Kdim, HoWo)
    # Collapse batch into the lane dim (sample-major): (G, Kdim, N*HoWo).
    patches = patches.transpose(1, 2, 0, 3).reshape(G, Kdim, N * HoWo)
    patches = patches.astype(jnp.bfloat16)                      # bf16 MXU operand

    # Weights as (G, Cout_g, Kdim), K ordered (kh, kw, cin) to match patches.
    w2 = weight_g.transpose(0, 4, 1, 2, 3).reshape(G, Cout_g, Kdim)
    w2 = w2.astype(jnp.bfloat16)                                 # bf16 MXU operand

    # Fuse bias / gamma / beta into one per-group f32 parameter block.
    params = jnp.stack([bias.reshape(G, Cout_g),
                        gamma.reshape(G, Cout_g),
                        beta.reshape(G, Cout_g)], axis=1)[..., None]  # (G,3,Cout_g,1)
    params = params.astype(jnp.float32)

    # Batch tiling: normally collapse all of N into lanes (fewest grid steps,
    # widest stores).  If the module's groups==1 fallback fired, split the batch
    # across a second parallel grid axis so v7x's two TensorCores both get work --
    # but only when the resulting lane width stays a multiple of 128.
    NT = 1
    if G == 1 and N % 2 == 0 and ((N // 2) * HoWo) % 128 == 0:
        NT = 2
    BN = N // NT

    kernel = functools.partial(
        _group_conv_gn_relu_kernel,
        eps=float(eps), group_norm=group_norm, apply_relu=apply_relu,
        bn=BN, ho_wo=HoWo)

    # Explicit scoped-VMEM budget from the block sizes (double-buffered blocks +
    # f32 accumulator), with generous headroom; well under v7x's 64 MiB physical.
    block_bytes = (2 * Kdim * BN * HoWo * 2          # patches (bf16, 2 buffers)
                   + 2 * Cout_g * Kdim * 2           # weights (bf16, 2 buffers)
                   + 2 * 3 * Cout_g * 4              # params  (f32,  2 buffers)
                   + 2 * Cout_g * BN * HoWo * 4      # output  (f32,  2 buffers)
                   + 4 * Cout_g * BN * HoWo * 4)     # f32 accumulator / temporaries
    vmem_limit = int(min(64 * 1024 * 1024, max(8 * 1024 * 1024, 4 * block_bytes)))

    out = pl.pallas_call(
        kernel,
        out_shape=jax.ShapeDtypeStruct((G, Cout_g, N * HoWo), x_nchw.dtype),
        grid_spec=pltpu.PrefetchScalarGridSpec(
            num_scalar_prefetch=0,
            grid=(G, NT),
            in_specs=[
                pl.BlockSpec((None, Kdim, BN * HoWo), lambda g, t: (g, 0, t)),
                pl.BlockSpec((None, Cout_g, Kdim), lambda g, t: (g, 0, 0)),
                pl.BlockSpec((None, 3, Cout_g, 1), lambda g, t: (g, 0, 0, 0)),
            ],
            out_specs=pl.BlockSpec((None, Cout_g, BN * HoWo),
                                   lambda g, t: (g, 0, t)),
        ),
        compiler_params=pltpu.CompilerParams(
            dimension_semantics=("parallel", "parallel"),
            vmem_limit_bytes=vmem_limit),
    )(patches, w2, params)

    # ---- host glue: (G, Cout_g, N*Ho*Wo) -> NCHW ----
    out = out.reshape(G, Cout_g, N, Ho, Wo).transpose(2, 0, 1, 3, 4)
    return out.reshape(N, Cout, Ho, Wo)


def _reference(x, weight_g, bias, gamma, beta, *, stride, padding, groups,
               eps=1e-5, group_norm=True, apply_relu=True):
    """Pure-JAX f32 reference matching PyTorch Conv2d+GroupNorm+ReLU semantics."""
    G, KH, KW, Cin_g, Cout_g = weight_g.shape
    w_oihw = weight_g.transpose(0, 4, 3, 1, 2).reshape(G * Cout_g, Cin_g, KH, KW)
    y = jax.lax.conv_general_dilated(
        x, w_oihw, window_strides=(stride, stride),
        padding=((padding, padding), (padding, padding)),
        dimension_numbers=("NCHW", "OIHW", "NCHW"),
        feature_group_count=groups)
    y = y + bias.reshape(1, -1, 1, 1)
    if group_norm:
        N, C, Ho, Wo = y.shape
        yg = y.reshape(N, G, -1)
        mean = yg.mean(axis=-1, keepdims=True)
        var = ((yg - mean) ** 2).mean(axis=-1, keepdims=True)
        yg = (yg - mean) * jax.lax.rsqrt(var + eps)
        y = yg.reshape(N, C, Ho, Wo)
        y = y * gamma.reshape(1, -1, 1, 1) + beta.reshape(1, -1, 1, 1)
    if apply_relu:
        y = jnp.maximum(y, 0.0)
    return y


if __name__ == "__main__":
    key = jax.random.PRNGKey(0)

    # Module config (matches GroupConv2d.__init__ semantics).
    N, Cin, H, W = 2, 8, 16, 16
    Cout, K, padding = 8, 3, 1

    # (requested_groups, stride): stride=2 exercises the strided im2col; the
    # groups=3 config triggers the module's groups=1 fallback (and the NT=2
    # batch-split grid path).
    for requested_groups, stride in ((2, 1), (2, 2), (3, 1)):
        groups = requested_groups
        if Cin % groups != 0:        # mirror the module's fallback
            groups = 1
        Cin_g, Cout_g = Cin // groups, Cout // groups

        kx, kw, kb, kg, kbt, key = jax.random.split(key, 6)
        x = jax.random.normal(kx, (N, Cin, H, W), jnp.float32)
        # Conv weights stored group-major, HWIO-per-group: (G, KH, KW, Cin_g, Cout_g).
        weight_g = 0.2 * jax.random.normal(
            kw, (groups, K, K, Cin_g, Cout_g), jnp.float32)
        bias = 0.1 * jax.random.normal(kb, (Cout,), jnp.float32)
        gamma = 1.0 + 0.1 * jax.random.normal(kg, (Cout,), jnp.float32)
        beta = 0.1 * jax.random.normal(kbt, (Cout,), jnp.float32)

        y = group_conv2d(x, weight_g, bias, gamma, beta,
                         stride=stride, padding=padding, groups=groups)
        y = jax.block_until_ready(y)
        y_ref = _reference(x, weight_g, bias, gamma, beta,
                           stride=stride, padding=padding, groups=groups)
        # bf16 MXU operands -> looser tolerance vs. the pure-f32 reference.
        np.testing.assert_allclose(np.asarray(y), np.asarray(y_ref),
                                   atol=3e-2, rtol=3e-2)

    print("KERNEL_OK")
</pallas_src>

<mosaic_0001>
module attributes {stable_mosaic.version = 11 : i64} {
  func.func @_group_conv_gn_relu_kernel(%arg0: i32, %arg1: i32, %arg2: memref<1x36x512xbf16, #tpu.memory_space<vmem>>, %arg3: memref<1x4x36xbf16, #tpu.memory_space<vmem>>, %arg4: memref<1x3x4x1xf32, #tpu.memory_space<vmem>>, %arg5: memref<1x4x512xf32, #tpu.memory_space<vmem>>) attributes {dimension_semantics = [#tpu.dimension_semantics<parallel>, #tpu.dimension_semantics<parallel>], iteration_bounds = array<i64: 2, 1>, scalar_prefetch = 0 : i64, scratch_operands = 0 : i64, tpu.core_type = #tpu.core_type<tc>, window_params = [{transform_indices = @transform_0, window_bounds = array<i64: 1, 36, 512>}, {transform_indices = @transform_1, window_bounds = array<i64: 1, 4, 36>}, {transform_indices = @transform_2, window_bounds = array<i64: 1, 3, 4, 1>}, {transform_indices = @transform_3, window_bounds = array<i64: 1, 4, 512>}]} {
    %c0 = arith.constant 0 : index
    %c0_0 = arith.constant 0 : index
    %c0_1 = arith.constant 0 : index
    %0 = vector.load %arg3[%c0, %c0_0, %c0_1] : memref<1x4x36xbf16, #tpu.memory_space<vmem>>, vector<1x4x36xbf16>
    %1 = vector.shape_cast %0 : vector<1x4x36xbf16> to vector<4x36xbf16>
    %c0_2 = arith.constant 0 : index
    %c0_3 = arith.constant 0 : index
    %c0_4 = arith.constant 0 : index
    %2 = vector.load %arg2[%c0_2, %c0_3, %c0_4] : memref<1x36x512xbf16, #tpu.memory_space<vmem>>, vector<1x36x512xbf16>
    %3 = vector.shape_cast %2 : vector<1x36x512xbf16> to vector<36x512xbf16>
    %cst = arith.constant dense<0.000000e+00> : vector<4x512xf32>
    %4 = tpu.matmul %1, %3, %cst {dimension_numbers = #tpu.dot_dimension_numbers<[1], [0], [0], [1], [0, 0, 1, 1], [], []>} : vector<4x36xbf16>, vector<36x512xbf16>, vector<4x512xf32> -> vector<4x512xf32>
    %c0_5 = arith.constant 0 : index
    %c0_6 = arith.constant 0 : index
    %c0_7 = arith.constant 0 : index
    %c0_8 = arith.constant 0 : index
    %5 = vector.load %arg4[%c0_5, %c0_6, %c0_7, %c0_8] : memref<1x3x4x1xf32, #tpu.memory_space<vmem>>, vector<1x1x4x1xf32>
    %6 = vector.shape_cast %5 : vector<1x1x4x1xf32> to vector<4x1xf32>
    %7 = vector.broadcast %6 : vector<4x1xf32> to vector<4x512xf32>
    %8 = arith.addf %4, %7 : vector<4x512xf32>
    %c0_9 = arith.constant 0 : index
    %c1 = arith.constant 1 : index
    %c0_10 = arith.constant 0 : index
    %c0_11 = arith.constant 0 : index
    %9 = vector.load %arg4[%c0_9, %c1, %c0_10, %c0_11] : memref<1x3x4x1xf32, #tpu.memory_space<vmem>>, vector<1x1x4x1xf32>
    %10 = vector.shape_cast %9 : vector<1x1x4x1xf32> to vector<4x1xf32>
    %c0_12 = arith.constant 0 : index
    %c2 = arith.constant 2 : index
    %c0_13 = arith.constant 0 : index
    %c0_14 = arith.constant 0 : index
    %11 = vector.load %arg4[%c0_12, %c2, %c0_13, %c0_14] : memref<1x3x4x1xf32, #tpu.memory_space<vmem>>, vector<1x1x4x1xf32>
    %12 = vector.shape_cast %11 : vector<1x1x4x1xf32> to vector<4x1xf32>
    %13 = vector.extract_strided_slice %8 {offsets = [0, 0], sizes = [4, 256], strides = [1, 1]} : vector<4x512xf32> to vector<4x256xf32>
    %14 = vector.shape_cast %13 : vector<4x256xf32> to vector<1x4x256xf32>
    %cst_15 = arith.constant dense<0.000000e+00> : vector<1xf32>
    %15 = vector.multi_reduction <add>, %14, %cst_15 [1, 2] : vector<1x4x256xf32> to vector<1xf32>
    %16 = vector.shape_cast %15 : vector<1xf32> to vector<1x1x1xf32>
    %17 = vector.extract %16[0, 0, 0] : f32 from vector<1x1x1xf32>
    %cst_16 = arith.constant 9.765625E-4 : f32
    %18 = arith.mulf %17, %cst_16 : f32
    %19 = vector.broadcast %18 : f32 to vector<4x256xf32>
    %20 = arith.subf %13, %19 : vector<4x256xf32>
    %21 = arith.mulf %20, %20 : vector<4x256xf32>
    %22 = vector.shape_cast %21 : vector<4x256xf32> to vector<1x4x256xf32>
    %cst_17 = arith.constant dense<0.000000e+00> : vector<1xf32>
    %23 = vector.multi_reduction <add>, %22, %cst_17 [1, 2] : vector<1x4x256xf32> to vector<1xf32>
    %24 = vector.shape_cast %23 : vector<1xf32> to vector<1x1x1xf32>
    %25 = vector.extract %24[0, 0, 0] : f32 from vector<1x1x1xf32>
    %cst_18 = arith.constant 9.765625E-4 : f32
    %26 = arith.mulf %25, %cst_18 : f32
    %cst_19 = arith.constant 9.99999974E-6 : f32
    %27 = arith.addf %26, %cst_19 : f32
    %28 = math.rsqrt %27 : f32
    %29 = vector.broadcast %28 : f32 to vector<4x1xf32>
    %30 = arith.mulf %10, %29 : vector<4x1xf32>
    %31 = vector.broadcast %18 : f32 to vector<4x1xf32>
    %32 = arith.mulf %31, %30 : vector<4x1xf32>
    %33 = arith.subf %12, %32 : vector<4x1xf32>
    %34 = vector.broadcast %30 : vector<4x1xf32> to vector<4x256xf32>
    %35 = arith.mulf %13, %34 : vector<4x256xf32>
    %36 = vector.broadcast %33 : vector<4x1xf32> to vector<4x256xf32>
    %37 = arith.addf %35, %36 : vector<4x256xf32>
    %cst_20 = arith.constant 0.000000e+00 : f32
    %38 = vector.broadcast %cst_20 : f32 to vector<4x256xf32>
    %39 = arith.maximumf %37, %38 : vector<4x256xf32>
    %c0_21 = arith.constant 0 : index
    %c0_22 = arith.constant 0 : index
    %c0_23 = arith.constant 0 : index
    %40 = vector.load %arg5[%c0_21, %c0_22, %c0_23] : memref<1x4x512xf32, #tpu.memory_space<vmem>>, vector<1x4x256xf32>
    %41 = vector.shape_cast %40 : vector<1x4x256xf32> to vector<4x256xf32>
    %42 = vector.shape_cast %39 : vector<4x256xf32> to vector<1x4x256xf32>
    tpu.vector_store %arg5[%c0_21, %c0_22, %c0_23], %42 {strides = array<i32>} : memref<1x4x512xf32, #tpu.memory_space<vmem>>, vector<1x4x256xf32>,
    %43 = vector.extract_strided_slice %8 {offsets = [0, 256], sizes = [4, 256], strides = [1, 1]} : vector<4x512xf32> to vector<4x256xf32>
    %44 = vector.shape_cast %43 : vector<4x256xf32> to vector<1x4x256xf32>
    %cst_24 = arith.constant dense<0.000000e+00> : vector<1xf32>
    %45 = vector.multi_reduction <add>, %44, %cst_24 [1, 2] : vector<1x4x256xf32> to vector<1xf32>
    %46 = vector.shape_cast %45 : vector<1xf32> to vector<1x1x1xf32>
    %47 = vector.extract %46[0, 0, 0] : f32 from vector<1x1x1xf32>
    %cst_25 = arith.constant 9.765625E-4 : f32
    %48 = arith.mulf %47, %cst_25 : f32
    %49 = vector.broadcast %48 : f32 to vector<4x256xf32>
    %50 = arith.subf %43, %49 : vector<4x256xf32>
    %51 = arith.mulf %50, %50 : vector<4x256xf32>
    %52 = vector.shape_cast %51 : vector<4x256xf32> to vector<1x4x256xf32>
    %cst_26 = arith.constant dense<0.000000e+00> : vector<1xf32>
    %53 = vector.multi_reduction <add>, %52, %cst_26 [1, 2] : vector<1x4x256xf32> to vector<1xf32>
    %54 = vector.shape_cast %53 : vector<1xf32> to vector<1x1x1xf32>
    %55 = vector.extract %54[0, 0, 0] : f32 from vector<1x1x1xf32>
    %cst_27 = arith.constant 9.765625E-4 : f32
    %56 = arith.mulf %55, %cst_27 : f32
    %cst_28 = arith.constant 9.99999974E-6 : f32
    %57 = arith.addf %56, %cst_28 : f32
    %58 = math.rsqrt %57 : f32
    %59 = vector.broadcast %58 : f32 to vector<4x1xf32>
    %60 = arith.mulf %10, %59 : vector<4x1xf32>
    %61 = vector.broadcast %48 : f32 to vector<4x1xf32>
    %62 = arith.mulf %61, %60 : vector<4x1xf32>
    %63 = arith.subf %12, %62 : vector<4x1xf32>
    %64 = vector.broadcast %60 : vector<4x1xf32> to vector<4x256xf32>
    %65 = arith.mulf %43, %64 : vector<4x256xf32>
    %66 = vector.broadcast %63 : vector<4x1xf32> to vector<4x256xf32>
    %67 = arith.addf %65, %66 : vector<4x256xf32>
    %cst_29 = arith.constant 0.000000e+00 : f32
    %68 = vector.broadcast %cst_29 : f32 to vector<4x256xf32>
    %69 = arith.maximumf %67, %68 : vector<4x256xf32>
    %c0_30 = arith.constant 0 : index
    %c0_31 = arith.constant 0 : index
    %c256 = arith.constant 256 : index
    %70 = vector.load %arg5[%c0_30, %c0_31, %c256] : memref<1x4x512xf32, #tpu.memory_space<vmem>>, vector<1x4x256xf32>
    %71 = vector.shape_cast %70 : vector<1x4x256xf32> to vector<4x256xf32>
    %72 = vector.shape_cast %69 : vector<4x256xf32> to vector<1x4x256xf32>
    tpu.vector_store %arg5[%c0_30, %c0_31, %c256], %72 {strides = array<i32>} : memref<1x4x512xf32, #tpu.memory_space<vmem>>, vector<1x4x256xf32>,
    return
  }
  func.func @transform_0(%arg0: i32, %arg1: i32) -> (i32, i32, i32) {
    %c0_i32 = arith.constant 0 : i32
    %c0_i32_0 = arith.constant 0 : i32
    return %arg0, %c0_i32, %arg1 : i32, i32, i32
  }
  func.func @transform_1(%arg0: i32, %arg1: i32) -> (i32, i32, i32) {
    %c0_i32 = arith.constant 0 : i32
    %c0_i32_0 = arith.constant 0 : i32
    %c0_i32_1 = arith.constant 0 : i32
    return %arg0, %c0_i32, %c0_i32_0 : i32, i32, i32
  }
  func.func @transform_2(%arg0: i32, %arg1: i32) -> (i32, i32, i32, i32) {
    %c0_i32 = arith.constant 0 : i32
    %c0_i32_0 = arith.constant 0 : i32
    %c0_i32_1 = arith.constant 0 : i32
    %c0_i32_2 = arith.constant 0 : i32
    return %arg0, %c0_i32, %c0_i32_0, %c0_i32_1 : i32, i32, i32, i32
  }
  func.func @transform_3(%arg0: i32, %arg1: i32) -> (i32, i32, i32) {
    %c0_i32 = arith.constant 0 : i32
    %c0_i32_0 = arith.constant 0 : i32
    return %arg0, %c0_i32, %arg1 : i32, i32, i32
  }
}

</mosaic_0001>

<llo_original>
// kernel: tpu_custom_call.1
$region0: #{tpu_custom_call.1}
  #allocation0 [shape = 'u32[]', space=smem, size = 0x4, offset = 0x4, fixed_abs, tag = 'smem constant byte address 0x4 - core index']
  #allocation1 [shape = 'u32[144,128]{1,0:T(1,128)}', space=vmem, size = 0x12000, scoped, tag = 'internal scratch']
  %s0 = inlined_call_operand.vmem [shape: bf16[2,36,512], index: 0, kind: input, shape index: {}]
  %s1 = inlined_call_operand.vmem [shape: bf16[2,4,36], index: 1, kind: input, shape index: {}]
  %s2 = inlined_call_operand.vmem [shape: f32[2,3,4,1], index: 2, kind: input, shape index: {}]
  %s3 = inlined_call_operand.hbm [shape: f32[2,4,512], index: 3, kind: output, shape index: {}]
  %s4 = sld [smem:[#allocation0]]
  $region45: #{tpu_custom_call.1} parent=0
    _
  %s6 = ssub.s32 1, %s4
  %s7 = scalar_select 0, %s6, %s4
  $region1: #{tpu_custom_call.1} parent=0
    #allocation2 [shape = 'u8[16384]{0}', space=vmem, size = 0x4000, scoped, tag = 'output window, operand 0']
    #allocation3 [shape = 's32[2]{0}', space=sflag, size = 0x8, scoped, tag = 'scoped memory for tpu_custom_call.1']
    %8 = vsyncpa [#allocation3], 0
    %s9 = scalar_lea.sflag [#allocation3], 1
    %10 = vsyncpa %s9, 0
    loop: start=0, step=1, limit=4
    $region2: #{tpu_custom_call.1} parent=1 // loop_pre_header
      _
    $region3: #{tpu_custom_call.1} parent=1 // loop_header
      %s12 = sphi 0, %s16
      %p13 = scmp.ge.s32.totalorder %s12, 4
      %s19 = sphi 0, %s31
      %s20 = sphi 0, %s27
      %s21 = sphi 0, %s19
      %s22 = sphi 0, %s20
      %s23 = sphi 0, %s21
      %s24 = sphi 0, %s22
      %s36 = sphi 0, %s38
      %s39 = sphi 0, %s36
      %s40 = sphi 0, %s39
      %s56 = sphi 0, %s40
      %s62 = sphi 0, %s64
      %s65 = sphi 0, %s62
      %s66 = sphi 0, %s65
      %s82 = sphi 0, %s66
      %s88 = sphi 0, %s90
      %s91 = sphi 0, %s88
      %s92 = sphi 0, %s91
      %s108 = sphi 0, %s92
      %s116 = sphi 0, %s118
      %s119 = sphi 0, %s116
      %s120 = sphi 0, %s119
      %s136 = sphi 0, %s120
    $region4: #{tpu_custom_call.1} parent=1 // loop_header_branch
      %15 = sbr.rel (%p13) target = $region8
    $region5: #{tpu_custom_call.1} parent=1 // loop_body
      %s17 = ssub.s32 %s12, 1
      %s18 = ssub.s32 %s12, 2
      %s25 = sadd.s32 1, %s20
      %p26 = scmp.ge.s32.totalorder %s25, 1
      %s27 = scalar_select %p26, 0, %s25
      %s28 = sadd.s32 1, %s19
      %s29 = scalar_select %p26, %s28, %s19
      %p30 = scmp.ge.s32.totalorder %s29, 2
      %s31 = scalar_select %p30, 0, %s29
      %s32 = ssub.s32 %s19, %s31
      %s33 = ssub.s32 %s20, %s27
      %s34 = sor.u32 %s32, %s33
      %p35 = scmp.eq.s32.totalorder %s34, 0
      %s37 = sadd.s32 %s36, 1
      %s38 = scalar_select %p35, %s36, %s37
      %p41 = pneg %p35
      %p42 = scmp.eq.s32.totalorder %s12, 1
      %p43 = por %p41, %p42
      %p44 = scmp.ne.s32.totalorder %s36, %s39
      %p45 = scmp.eq.s32.totalorder %s12, 0
      %p46 = por %p44, %p45
      %p47 = scmp.ne.s32.totalorder %s36, %s39
      %p48 = scmp.eq.s32.totalorder %s17, 1
      %p49 = por %p47, %p48
      %p50 = scmp.ne.s32.totalorder %s39, %s40
      %p51 = scmp.eq.s32.totalorder %s17, 0
      %p52 = por %p50, %p51
      %p53 = scmp.ne.s32.totalorder %s39, %s40
      %p54 = scmp.eq.s32.totalorder %s18, 1
      %p55 = por %p53, %p54
      %p57 = scmp.ne.s32.totalorder %s40, %s56
      %p58 = scmp.eq.s32.totalorder %s18, 0
      %p59 = por %p57, %p58
      %s60 = ssub.s32 %s19, %s31
      %p61 = scmp.eq.s32.totalorder %s60, 0
      %s63 = sadd.s32 %s62, 1
      %s64 = scalar_select %p61, %s62, %s63
      %p67 = pneg %p61
      %p68 = scmp.eq.s32.totalorder %s12, 1
      %p69 = por %p67, %p68
      %p70 = scmp.ne.s32.totalorder %s62, %s65
      %p71 = scmp.eq.s32.totalorder %s12, 0
      %p72 = por %p70, %p71
      %p73 = scmp.ne.s32.totalorder %s62, %s65
      %p74 = scmp.eq.s32.totalorder %s17, 1
      %p75 = por %p73, %p74
      %p76 = scmp.ne.s32.totalorder %s65, %s66
      %p77 = scmp.eq.s32.totalorder %s17, 0
      %p78 = por %p76, %p77
      %p79 = scmp.ne.s32.totalorder %s65, %s66
      %p80 = scmp.eq.s32.totalorder %s18, 1
      %p81 = por %p79, %p80
      %p83 = scmp.ne.s32.totalorder %s66, %s82
      %p84 = scmp.eq.s32.totalorder %s18, 0
      %p85 = por %p83, %p84
      %s86 = ssub.s32 %s19, %s31
      %p87 = scmp.eq.s32.totalorder %s86, 0
      %s89 = sadd.s32 %s88, 1
      %s90 = scalar_select %p87, %s88, %s89
      %p93 = pneg %p87
      %p94 = scmp.eq.s32.totalorder %s12, 1
      %p95 = por %p93, %p94
      %p96 = scmp.ne.s32.totalorder %s88, %s91
      %p97 = scmp.eq.s32.totalorder %s12, 0
      %p98 = por %p96, %p97
      %p99 = scmp.ne.s32.totalorder %s88, %s91
      %p100 = scmp.eq.s32.totalorder %s17, 1
      %p101 = por %p99, %p100
      %p102 = scmp.ne.s32.totalorder %s91, %s92
      %p103 = scmp.eq.s32.totalorder %s17, 0
      %p104 = por %p102, %p103
      %p105 = scmp.ne.s32.totalorder %s91, %s92
      %p106 = scmp.eq.s32.totalorder %s18, 1
      %p107 = por %p105, %p106
      %p109 = scmp.ne.s32.totalorder %s92, %s108
      %p110 = scmp.eq.s32.totalorder %s18, 0
      %p111 = por %p109, %p110
      %s112 = ssub.s32 %s19, %s31
      %s113 = ssub.s32 %s20, %s27
      %s114 = sor.u32 %s112, %s113
      %p115 = scmp.eq.s32.totalorder %s114, 0
      %s117 = sadd.s32 %s116, 1
      %s118 = scalar_select %p115, %s116, %s117
      %p121 = pneg %p115
      %p122 = scmp.eq.s32.totalorder %s12, 1
      %p123 = por %p121, %p122
      %p124 = scmp.ne.s32.totalorder %s116, %s119
      %p125 = scmp.eq.s32.totalorder %s12, 0
      %p126 = por %p124, %p125
      %p127 = scmp.ne.s32.totalorder %s116, %s119
      %p128 = scmp.eq.s32.totalorder %s17, 1
      %p129 = por %p127, %p128
      %p130 = scmp.ne.s32.totalorder %s119, %s120
      %p131 = scmp.eq.s32.totalorder %s17, 0
      %p132 = por %p130, %p131
      %p133 = scmp.ne.s32.totalorder %s119, %s120
      %p134 = scmp.eq.s32.totalorder %s18, 1
      %p135 = por %p133, %p134
      %p137 = scmp.ne.s32.totalorder %s120, %s136
      %p138 = scmp.eq.s32.totalorder %s18, 0
      %p139 = por %p137, %p138
      %p140 = scmp.le.s32.totalorder 1, %s12
      %p141 = scmp.lt.s32.totalorder %s12, 3
      %p142 = pnand %p140, %p141
      %p143 = pneg %p142
      // Predicated region
      $region9: #{tpu_custom_call.1} parent=5 // pred_check
        _
      $region10: #{tpu_custom_call.1} parent=5 // pred_check_branch
        %145 = sbr.rel (%p142) target = $region12
      $region11: #{tpu_custom_call.1} parent=5 // pred_region
        %s146 = ssub.s32 %s12, 1
      $region12: #{tpu_custom_call.1} parent=5 // pred_fallthru
        _
      %p147 = scmp.lt.s32.totalorder %s12, 2
      // Predicated region
      $region13: #{tpu_custom_call.1} parent=5 // pred_check
        %p148 = pneg %p147
      $region14: #{tpu_custom_call.1} parent=5 // pred_check_branch
        %150 = sbr.rel (%p148) target = $region16
      $region15: #{tpu_custom_call.1} parent=5 // pred_region
        // Predicated region
        $region17: #{tpu_custom_call.1} parent=15 // pred_check
          %p151 = pneg %p46
        $region18: #{tpu_custom_call.1} parent=15 // pred_check_branch
          %153 = sbr.rel (%p151) target = $region20
        $region19: #{tpu_custom_call.1} parent=15 // pred_region
          %s154 = smul.u32 4, %s20
          %p155 = scmp.lt.s32.totalorder %s19, 1
          %s156 = scalar_select %p155, %s19, 1
          %p157 = scmp.lt.s32.totalorder %s154, 3
          %s158 = scalar_select %p157, %s154, 3
          %s159 = smul.addr %s156, 20
          %s160 = sadd.s32 %s158, %s159
          %s161 = smul.addr %s160, 4
          %s162 = scalar_lea.vmem %s0, %s161
          %s163 = smul.u32 4, %s20
        $region20: #{tpu_custom_call.1} parent=15 // pred_fallthru
          _
        // Predicated region
        $region21: #{tpu_custom_call.1} parent=15 // pred_check
          %p164 = pneg %p72
        $region22: #{tpu_custom_call.1} parent=15 // pred_check_branch
          %166 = sbr.rel (%p164) target = $region24
        $region23: #{tpu_custom_call.1} parent=15 // pred_region
          %p167 = scmp.lt.s32.totalorder %s19, 1
          %s168 = scalar_select %p167, %s19, 1
          %s169 = smul.addr %s168, 2
          %s170 = scalar_lea.vmem %s1, %s169
        $region24: #{tpu_custom_call.1} parent=15 // pred_fallthru
          _
        // Predicated region
        $region25: #{tpu_custom_call.1} parent=15 // pred_check
          %p171 = pneg %p98
        $region26: #{tpu_custom_call.1} parent=15 // pred_check_branch
          %173 = sbr.rel (%p171) target = $region28
        $region27: #{tpu_custom_call.1} parent=15 // pred_region
          %p174 = scmp.lt.s32.totalorder %s19, 1
          %s175 = scalar_select %p174, %s19, 1
          %s176 = smul.addr %s175, 3
          %s177 = smul.addr %s176, 4
          %s178 = scalar_lea.vmem %s2, %s177
        $region28: #{tpu_custom_call.1} parent=15 // pred_fallthru
          _
      $region16: #{tpu_custom_call.1} parent=5 // pred_fallthru
        _
      %p179 = scmp.le.s32.totalorder 1, %s12
      %p180 = scmp.lt.s32.totalorder %s12, 3
      %p181 = pnand %p179, %p180
      %p182 = pneg %p181
      // Predicated region
      $region29: #{tpu_custom_call.1} parent=5 // pred_check
        _
      $region30: #{tpu_custom_call.1} parent=5 // pred_check_branch
        %184 = sbr.rel (%p181) target = $region32
      $region31: #{tpu_custom_call.1} parent=5 // pred_region
        %s185 = ssub.s32 %s12, 1
        %s186 = smul.u32 4, %s22
        %p187 = scmp.lt.s32.totalorder %s21, 1
        %s188 = scalar_select %p187, %s21, 1
        %p189 = scmp.lt.s32.totalorder %s186, 3
        %s190 = scalar_select %p189, %s186, 3
        %s191 = smul.addr %s188, 20
        %s192 = sadd.s32 %s190, %s191
        %s193 = smul.addr %s192, 4
        %s194 = scalar_lea.vmem %s0, %s193
        %p195 = pneg %p52
        %p196 = pneg %p49
        %p197 = scmp.lt.s32.totalorder %s21, 1
        %s198 = scalar_select %p197, %s21, 1
        %s199 = smul.addr %s198, 2
        %s200 = scalar_lea.vmem %s1, %s199
        %p201 = pneg %p78
        %p202 = pneg %p75
        %p203 = scmp.lt.s32.totalorder %s21, 1
        %s204 = scalar_select %p203, %s21, 1
        %s205 = smul.addr %s204, 3
        %s206 = smul.addr %s205, 4
        %s207 = scalar_lea.vmem %s2, %s206
        %p208 = pneg %p104
        %p209 = pneg %p101
        %p210 = pneg %p132
        %p211 = pneg %p129
        %s212 = sand.u32 %s119, 1
        %s213 = scalar_lea.sflag [#allocation3], %s212
        %s214 = sand.u32 %s119, 1
        %s215 = smul.addr %s214, 16
        %s216 = scalar_lea.vmem [#allocation2], %s215
        %s217 = smul.u32 4, %s22
        %p218 = scmp.lt.s32.totalorder %s21, 1
        %s219 = scalar_select %p218, %s21, 1
        %p220 = scmp.lt.s32.totalorder %s217, 3
        %s221 = scalar_select %p220, %s217, 3
        %s222 = smul.addr %s219, 20
        %s223 = sadd.s32 %s221, %s222
        %s224 = smul.addr %s223, 4
        %s225 = scalar_lea.vmem %s0, %s224
        %s226 = smul.u32 4, %s22
        %p227 = scmp.lt.s32.totalorder %s21, 1
        %s228 = scalar_select %p227, %s21, 1
        %s229 = smul.addr %s228, 2
        %s230 = scalar_lea.vmem %s1, %s229
        %p231 = scmp.lt.s32.totalorder %s21, 1
        %s232 = scalar_select %p231, %s21, 1
        %s233 = smul.addr %s232, 3
        %s234 = smul.addr %s233, 4
        %s235 = scalar_lea.vmem %s2, %s234
        %s236 = smul.u32 4, %s22
        %v238 = vld [vmem:[%s230] sm:$0x3]
        %v239 = vld [vmem:[%s225] sm:$0xff]
        %v240 = vld [vmem:[%s225 + $0x8] sm:$0xff]
        %v241 = vld [vmem:[%s225 + $0x10] sm:$0xff]
        %v242 = vld [vmem:[%s225 + $0x18] sm:$0xff]
        %v243 = vld [vmem:[%s225 + $0x20] sm:$0xff]
        %v244 = vld [vmem:[%s225 + $0x28] sm:$0xff]
        %v245 = vld [vmem:[%s225 + $0x30] sm:$0xff]
        %v246 = vld [vmem:[%s225 + $0x38] sm:$0xff]
        %v247 = vld [vmem:[%s225 + $0x40] sm:$0x33]
        %v248 = vld [vmem:[%s225 + $0x48] sm:$0x33]
        %v249 = vld [vmem:[%s235] sm:$0xf]
        %251 = vset.pattern.permute.xlu0 0
        %252 = vperm.xlu0 %251, %v249
        %v253 = vpop.permute.xlu0 %252
        %v265 = vunpack.c.l.b16 %v239
        %v266 = vunpack.c.h.b16 %v239
        %v267 = vunpack.c.l.b16 %v240
        %v268 = vunpack.c.h.b16 %v240
        %v269 = vunpack.c.l.b16 %v241
        %v270 = vunpack.c.h.b16 %v241
        %v271 = vunpack.c.l.b16 %v242
        %v272 = vunpack.c.h.b16 %v242
        %v273 = vunpack.c.l.b16 %v243
        %v274 = vunpack.c.h.b16 %v243
        %v275 = vunpack.c.l.b16 %v244
        %v276 = vunpack.c.h.b16 %v244
        %v277 = vunpack.c.l.b16 %v245
        %v278 = vunpack.c.h.b16 %v245
        %v279 = vunpack.c.l.b16 %v246
        %v280 = vunpack.c.h.b16 %v246
        %v281 = vunpack.c.l.b16 %v247
        %v282 = vunpack.c.h.b16 %v247
        %v283 = vunpack.c.l.b16 %v248
        %v284 = vunpack.c.h.b16 %v248
        %v285 = vpack.c.b16 %v269, %v265
        %v286 = vpack.c.b16 %v270, %v266
        %v287 = vpack.c.b16 %v271, %v267
        %v288 = vpack.c.b16 %v272, %v268
        %v289 = vpack.c.b16 %v277, %v273
        %v290 = vpack.c.b16 %v278, %v274
        %v291 = vpack.c.b16 %v279, %v275
        %v292 = vpack.c.b16 %v280, %v276
        %v293 = vpack.c.b16 %v281, %v281
        %v294 = vpack.c.b16 %v282, %v282
        %v295 = vpack.c.b16 %v283, %v283
        %v296 = vpack.c.b16 %v284, %v284
        %vm305 = vcmask 293888
        %v307 = vsel %vm305, %v238, 0
        %vm309 = vcmask 1041408
        %v311 = vsel %vm309, %v293, 0
        %v314 = vsel %vm309, %v294, 0
        %v317 = vsel %vm309, %v295, 0
        %v320 = vsel %vm309, %v296, 0
        %322 = vmatprep.subr.bf16.mxu0 %v286
        %323 = vmatpush1.bf16.msra.mxu0 %v285
        %324 = vmatprep.subr.bf16.mxu0 %v290
        %325 = vmatpush1.bf16.msra.mxu0 %v289
        %326 = vmatprep.subr.bf16.mxu0 %v314
        %327 = vmatpush1.bf16.msra.mxu0 %v311
        %328 = vmatprep.subr.bf16.mxu0 0
        %329 = vmatpush1.bf16.msra.mxu0 0
        %330 = vmatprep.subr.bf16.mxu0 0
        %331 = vmatpush1.bf16.msra.mxu0 0
        %332 = vmatprep.subr.bf16.mxu0 0
        %333 = vmatpush1.bf16.msra.mxu0 0
        %334 = vmatprep.subr.bf16.mxu0 0
        %335 = vmatpush1.bf16.msra.mxu0 0
        %336 = vmatprep.subr.bf16.mxu0 0
        %337 = vmatpush1.bf16.msra.mxu0 0
        %338 = vmatprep.subr.bf16.mxu0 0
        %339 = vmatpush1.bf16.msra.mxu0 0
        %340 = vmatprep.subr.bf16.mxu0 0
        %341 = vmatpush1.bf16.msra.mxu0 0
        %342 = vmatprep.subr.bf16.mxu0 0
        %343 = vmatpush1.bf16.msra.mxu0 0
        %344 = vmatprep.subr.bf16.mxu0 0
        %345 = vmatpush1.bf16.msra.mxu0 0
        %346 = vmatprep.subr.bf16.mxu0 0
        %347 = vmatpush1.bf16.msra.mxu0 0
        %348 = vmatprep.subr.bf16.mxu0 0
        %349 = vmatpush1.bf16.msra.mxu0 0
        %350 = vmatprep.subr.bf16.mxu0 0
        %351 = vmatpush1.bf16.msra.mxu0 0
        %352 = vmatprep.subr.bf16.mxu0 0
        %353 = vmatpush1.bf16.msra.mxu0 0
        %354 = vmatprep.mubr.bf16.mxu0 0
        %355 = vmatmul.mubr.bf16.gmra.mrb[0].mxu0 %v307
        %v356 = vpop.f32.mrb[0].mxu0
        %v357 = vadd.f32 %v253, %v356
        %v358 = vpop.f32.mrb[0].mxu0
        %v359 = vadd.f32 %v253, %v358
        %v360 = vpop.f32.mrb[0].mxu0
        %v361 = vpop.f32.mrb[0].mxu0
        %362 = vdwg.mxu0
        %363 = vmatprep.subr.bf16.mxu0 %v288
        %364 = vmatpush1.bf16.msra.mxu0 %v287
        %365 = vmatprep.subr.bf16.mxu0 %v292
        %366 = vmatpush1.bf16.msra.mxu0 %v291
        %367 = vmatprep.subr.bf16.mxu0 %v320
        %368 = vmatpush1.bf16.msra.mxu0 %v317
        %369 = vmatprep.subr.bf16.mxu0 0
        %370 = vmatpush1.bf16.msra.mxu0 0
        %371 = vmatprep.subr.bf16.mxu0 0
        %372 = vmatpush1.bf16.msra.mxu0 0
        %373 = vmatprep.subr.bf16.mxu0 0
        %374 = vmatpush1.bf16.msra.mxu0 0
        %375 = vmatprep.subr.bf16.mxu0 0
        %376 = vmatpush1.bf16.msra.mxu0 0
        %377 = vmatprep.subr.bf16.mxu0 0
        %378 = vmatpush1.bf16.msra.mxu0 0
        %379 = vmatprep.subr.bf16.mxu0 0
        %380 = vmatpush1.bf16.msra.mxu0 0
        %381 = vmatprep.subr.bf16.mxu0 0
        %382 = vmatpush1.bf16.msra.mxu0 0
        %383 = vmatprep.subr.bf16.mxu0 0
        %384 = vmatpush1.bf16.msra.mxu0 0
        %385 = vmatprep.subr.bf16.mxu0 0
        %386 = vmatpush1.bf16.msra.mxu0 0
        %387 = vmatprep.subr.bf16.mxu0 0
        %388 = vmatpush1.bf16.msra.mxu0 0
        %389 = vmatprep.subr.bf16.mxu0 0
        %390 = vmatpush1.bf16.msra.mxu0 0
        %391 = vmatprep.subr.bf16.mxu0 0
        %392 = vmatpush1.bf16.msra.mxu0 0
        %393 = vmatprep.subr.bf16.mxu0 0
        %394 = vmatpush1.bf16.msra.mxu0 0
        %395 = vmatprep.mubr.bf16.mxu0 0
        %396 = vmatmul.mubr.bf16.gmra.mrb[0].mxu0 %v307
        %v397 = vpop.f32.mrb[0].mxu0
        %v398 = vadd.f32 %v253, %v397
        %v399 = vpop.f32.mrb[0].mxu0
        %v400 = vadd.f32 %v253, %v399
        %v401 = vpop.f32.mrb[0].mxu0
        %v402 = vpop.f32.mrb[0].mxu0
        %403 = vdwg.mxu0
        %s404 = scalar_lea.vmem %s235, 4
        %v405 = vld [vmem:[%s404] sm:$0xf]
        %s406 = scalar_lea.vmem %s235, 8
        %v407 = vld [vmem:[%s406] sm:$0xf]
        %vm408 = vcmask 1043456
        %v409 = vsel %vm408, %v357, 0.0
        %v410 = vsel %vm408, %v359, 0.0
        %v411 = vadd.f32 %v409, %v410
        %412 = vadd.xlane.f32.xlu0 %v411
        %v413 = vpop.xlane.xlu0 %412
        %v414 = vrot.slane %v413, 4
        %v415 = vadd.f32 %v413, %v414
        %v416 = vrot.slane %v415, 2
        %v417 = vadd.f32 %v415, %v416
        %v418 = vrot.slane %v417, 1
        %v419 = vadd.f32 %v417, %v418
        %s420 = vtos %v419
        %s421 = smul.f32 %s420, 0.0009765625
        %v422 = vstv %s421
        %v423 = vsub.f32 %v357, %v422
        %v424 = vsub.f32 %v359, %v422
        %v425 = vmul.f32 %v423, %v423
        %v426 = vmul.f32 %v424, %v424
        %v427 = vsel %vm408, %v425, 0.0
        %v428 = vsel %vm408, %v426, 0.0
        %v429 = vadd.f32 %v427, %v428
        %430 = vadd.xlane.f32.xlu0 %v429
        %v431 = vpop.xlane.xlu0 %430
        %v432 = vrot.slane %v431, 4
        %v433 = vadd.f32 %v431, %v432
        %v434 = vrot.slane %v433, 2
        %v435 = vadd.f32 %v433, %v434
        %v436 = vrot.slane %v435, 1
        %v437 = vadd.f32 %v435, %v436
        %s438 = vtos %v437
        %s439 = smul.f32 %s438, 0.0009765625
        %s440 = sadd.f32 %s439, 1e-05
        %v441 = vstv %s440
        %v442 = vrsqrt.pop %v441
        %s443 = vtos %v442
        %v444 = vstv %s443
        %v445 = vmul.f32 %v405, %v444
        %v446 = vmul.f32 %v422, %v445
        %v447 = vsub.f32 %v407, %v446
        %449 = vset.pattern.permute.xlu0 0
        %450 = vperm.xlu0 %449, %v445
        %v451 = vpop.permute.xlu0 %450
        %v453 = vmul.f32 %v357, %v451
        %v454 = vmul.f32 %v359, %v451
        %456 = vset.pattern.permute.xlu0 0
        %457 = vperm.xlu0 %456, %v447
        %v458 = vpop.permute.xlu0 %457
        %v460 = vadd.f32 %v453, %v458
        %v461 = vadd.f32 %v454, %v458
        %v462 = vmax.f32 %v460, 0.0
        %v463 = vmax.f32 %v461, 0.0
        %v466 = vcombine.low %v462, %v463
        %468 = vst [vmem:[%s216] sm:$0xff] %v466
        %v469 = vsel %vm408, %v398, 0.0
        %v470 = vsel %vm408, %v400, 0.0
        %v471 = vadd.f32 %v469, %v470
        %472 = vadd.xlane.f32.xlu0 %v471
        %v473 = vpop.xlane.xlu0 %472
        %v474 = vrot.slane %v473, 4
        %v475 = vadd.f32 %v473, %v474
        %v476 = vrot.slane %v475, 2
        %v477 = vadd.f32 %v475, %v476
        %v478 = vrot.slane %v477, 1
        %v479 = vadd.f32 %v477, %v478
        %s480 = vtos %v479
        %s481 = smul.f32 %s480, 0.0009765625
        %v482 = vstv %s481
        %v483 = vsub.f32 %v398, %v482
        %v484 = vsub.f32 %v400, %v482
        %v485 = vmul.f32 %v483, %v483
        %v486 = vmul.f32 %v484, %v484
        %v487 = vsel %vm408, %v485, 0.0
        %v488 = vsel %vm408, %v486, 0.0
        %v489 = vadd.f32 %v487, %v488
        %490 = vadd.xlane.f32.xlu0 %v489
        %v491 = vpop.xlane.xlu0 %490
        %v492 = vrot.slane %v491, 4
        %v493 = vadd.f32 %v491, %v492
        %v494 = vrot.slane %v493, 2
        %v495 = vadd.f32 %v493, %v494
        %v496 = vrot.slane %v495, 1
        %v497 = vadd.f32 %v495, %v496
        %s498 = vtos %v497
        %s499 = smul.f32 %s498, 0.0009765625
        %s500 = sadd.f32 %s499, 1e-05
        %v501 = vstv %s500
        %v502 = vrsqrt.pop %v501
        %s503 = vtos %v502
        %v504 = vstv %s503
        %v505 = vmul.f32 %v405, %v504
        %v506 = vmul.f32 %v482, %v505
        %v507 = vsub.f32 %v407, %v506
        %509 = vset.pattern.permute.xlu0 0
        %510 = vperm.xlu0 %509, %v505
        %v511 = vpop.permute.xlu0 %510
        %v513 = vmul.f32 %v398, %v511
        %v514 = vmul.f32 %v400, %v511
        %516 = vset.pattern.permute.xlu0 0
        %517 = vperm.xlu0 %516, %v507
        %v518 = vpop.permute.xlu0 %517
        %v520 = vadd.f32 %v513, %v518
        %v521 = vadd.f32 %v514, %v518
        %v522 = vmax.f32 %v520, 0.0
        %v523 = vmax.f32 %v521, 0.0
        %v526 = vcombine.low %v522, %v523
        %528 = vst [vmem:[%s216 + $0x8] sm:$0xff] %v526
        %s529 = sand.u32 %s119, 1
        %s530 = scalar_lea.sflag [#allocation3], %s529
        %s531 = sand.u32 %s119, 1
        %s532 = smul.addr %s531, 16
        %s533 = scalar_lea.vmem [#allocation2], %s532
        // Predicated region
        $region33: #{tpu_custom_call.1} parent=31 // pred_check
          %p534 = pneg %p129
        $region34: #{tpu_custom_call.1} parent=31 // pred_check_branch
          %536 = sbr.rel (%p534) target = $region36
        $region35: #{tpu_custom_call.1} parent=31 // pred_region
          %s537 = smul.u32 4, %s22
          %s539 = ssub.s32 256, 256
          %540 = vsyncadd %s530, %s539
          %s541 = smul.addr %s21, 4
          %s542 = sadd.s32 %s537, %s541
          %s543 = smul.addr %s542, 64
          %s544 = scalar_lea.hbm %s3, %s543
          %s546 = sshll.u32 %s533, 4
          %s547 = int_to_ptr.vmem [resolvable:$true] %s546
          %549 = dma.vmem_to_hbm [thread:$0]  %s547, 256, %s544, %s530
        $region36: #{tpu_custom_call.1} parent=31 // pred_fallthru
          _
      $region32: #{tpu_custom_call.1} parent=5 // pred_fallthru
        _
      %p550 = scmp.le.s32.totalorder 2, %s12
      // Predicated region
      $region37: #{tpu_custom_call.1} parent=5 // pred_check
        %p551 = pneg %p550
      $region38: #{tpu_custom_call.1} parent=5 // pred_check_branch
        %553 = sbr.rel (%p551) target = $region40
      $region39: #{tpu_custom_call.1} parent=5 // pred_region
        %s554 = ssub.s32 %s12, 2
        // Predicated region
        $region41: #{tpu_custom_call.1} parent=39 // pred_check
          %p555 = pneg %p135
        $region42: #{tpu_custom_call.1} parent=39 // pred_check_branch
          %557 = sbr.rel (%p555) target = $region44
        $region43: #{tpu_custom_call.1} parent=39 // pred_region
          %s558 = sand.u32 %s120, 1
          %s559 = scalar_lea.sflag [#allocation3], %s558
          %s560 = sand.u32 %s120, 1
          %s561 = smul.addr %s560, 16
          %s562 = scalar_lea.vmem [#allocation2], %s561
          %563 = dma.done %s559, 256
        $region44: #{tpu_custom_call.1} parent=39 // pred_fallthru
          _
      $region40: #{tpu_custom_call.1} parent=5 // pred_fallthru
        _
    $region6: #{tpu_custom_call.1} parent=1 // loop_footer
      %s16 = sadd.s32 1, %s12
    $region7: #{tpu_custom_call.1} parent=1 // loop_footer_branch
      %11 = sbr.rel target = $region3
    $region8: #{tpu_custom_call.1} parent=1 // loop_exit
      _
    %564 = vsyncpa [#allocation3], 1
    %s565 = scalar_lea.sflag [#allocation3], 1
    %566 = vsyncpa %s565, 1

</llo_original>
